<compile_context>
chip_gen: v7x
topology: tpu7x:2x2x1
jax: 0.10.0
libtpu: 0.0.40
codegen_flags: <defaults>
</compile_context>

<pallas_src>
import functools

import jax
import jax.numpy as jnp
from jax.experimental import pallas as pl
from jax.experimental.pallas import tpu as pltpu

_LANE = 128
_MAX_TILE_B = 2048  # lane-axis tile width for large batches (multiple of 128)


def _patch_size_kernel(probs_ref, out_ref, *, out_consts):
    """probs_ref: [3, TB] f32 (scales on sublanes, batch on lanes).
    out_ref:   [1, TB] i32 (lane-dense)."""
    p = probs_ref[...]            # (3, TB)
    p0 = p[0:1, :]                # (1, TB) — sublane row slices, full-lane width
    p1 = p[1:2, :]
    p2 = p[2:3, :]

    o0, o1, o2 = (jnp.int32(c) for c in out_consts)

    # 3-way argmax with torch-style first-index tie-breaking, as a pure-VPU
    # select chain (no cross-lane reduce).  Selects produce the final int32
    # patch sizes directly (base*scale baked in at trace time).
    # NOTE: NaN probs fall through to out_consts[2]; torch.argmax handles NaN
    # differently — only relevant if upstream softmax can emit NaN.
    is0 = jnp.logical_and(p0 >= p1, p0 >= p2)
    is1 = p1 >= p2
    out_ref[...] = jnp.where(is0, o0, jnp.where(is1, o1, o2))


def patch_size_adapter(patch_probs,
                       base_patch_size=64,
                       scale_factors=(0.75, 1.0, 1.25)):
    """JAX/Pallas equivalent of PatchSizeAdapter.forward.

    Args:
      patch_probs: [B, 3] float array of patch-size probabilities.
    Returns:
      [B] int32 array of optimal patch sizes.
    """
    patch_probs = jnp.asarray(patch_probs, dtype=jnp.float32)
    B, S = patch_probs.shape
    assert S == len(scale_factors) == 3, "expects 3 scale factors"

    # Python int(base*scale) == trunc-toward-zero, matching torch `.int()`.
    out_consts = tuple(int(base_patch_size * float(s)) for s in scale_factors)

    # Lane-dense layout: [3, B_pad] with B_pad a multiple of the lane tile.
    b_pad = max(_LANE, ((B + _LANE - 1) // _LANE) * _LANE)
    tile_b = min(_MAX_TILE_B, b_pad)
    b_pad = ((b_pad + tile_b - 1) // tile_b) * tile_b

    probs_t = jnp.zeros((3, b_pad), dtype=jnp.float32)
    probs_t = probs_t.at[:, :B].set(patch_probs.T)

    kernel = functools.partial(_patch_size_kernel, out_consts=out_consts)

    out = pl.pallas_call(
        kernel,
        out_shape=jax.ShapeDtypeStruct((1, b_pad), jnp.int32),
        grid_spec=pltpu.PrefetchScalarGridSpec(
            num_scalar_prefetch=0,
            grid=(b_pad // tile_b,),
            # Block shapes satisfy the (8,128) rule: leading dims (3 / 1) equal
            # the full array dims, trailing dim is a multiple of 128.
            in_specs=[pl.BlockSpec((3, tile_b), lambda i: (0, i))],
            out_specs=pl.BlockSpec((1, tile_b), lambda i: (0, i)),
        ),
        compiler_params=pltpu.CompilerParams(
            dimension_semantics=("parallel",)),   # v7x: split batch across TCs
    )(probs_t)

    return out[0, :B]                              # [B] int32


def _reference(patch_probs, base_patch_size=64, scale_factors=(0.75, 1.0, 1.25)):
    """Pure-JAX reference mirroring the PyTorch forward."""
    indices = jnp.argmax(patch_probs, axis=1)
    scales = jnp.asarray(scale_factors, dtype=jnp.float32)
    selected = scales[indices]
    return (base_patch_size * selected).astype(jnp.int32)


if __name__ == "__main__":
    key = jax.random.PRNGKey(0)
    B = 8
    logits = jax.random.normal(key, (B, 3), dtype=jnp.float32)
    patch_probs = jax.nn.softmax(logits, axis=1)   # [B, 3] probability distribution

    optimal_sizes = patch_size_adapter(patch_probs)
    optimal_sizes = jax.block_until_ready(optimal_sizes)

    expected = _reference(patch_probs)
    assert optimal_sizes.shape == (B,)
    assert optimal_sizes.dtype == jnp.int32
    assert bool(jnp.all(optimal_sizes == expected)), (optimal_sizes, expected)

    # Also exercise a batch that spans multiple lane tiles / grid steps.
    B2 = 3000
    logits2 = jax.random.normal(jax.random.PRNGKey(1), (B2, 3), dtype=jnp.float32)
    probs2 = jax.nn.softmax(logits2, axis=1)
    got2 = jax.block_until_ready(patch_size_adapter(probs2))
    assert bool(jnp.all(got2 == _reference(probs2)))

    print("KERNEL_OK")
</pallas_src>

<mosaic_0001>
module attributes {stable_mosaic.version = 11 : i64} {
  func.func @_patch_size_kernel(%arg0: i32, %arg1: memref<3x128xf32, #tpu.memory_space<vmem>>, %arg2: memref<1x128xi32, #tpu.memory_space<vmem>>) attributes {dimension_semantics = [#tpu.dimension_semantics<parallel>], iteration_bounds = array<i64: 1>, scalar_prefetch = 0 : i64, scratch_operands = 0 : i64, tpu.core_type = #tpu.core_type<tc>, window_params = [{transform_indices = @transform_0, window_bounds = array<i64: 3, 128>}, {transform_indices = @transform_1, window_bounds = array<i64: 1, 128>}]} {
    %c0 = arith.constant 0 : index
    %c0_0 = arith.constant 0 : index
    %0 = vector.load %arg1[%c0, %c0_0] : memref<3x128xf32, #tpu.memory_space<vmem>>, vector<3x128xf32>
    %1 = vector.extract_strided_slice %0 {offsets = [0, 0], sizes = [1, 128], strides = [1, 1]} : vector<3x128xf32> to vector<1x128xf32>
    %2 = vector.extract_strided_slice %0 {offsets = [1, 0], sizes = [1, 128], strides = [1, 1]} : vector<3x128xf32> to vector<1x128xf32>
    %3 = vector.extract_strided_slice %0 {offsets = [2, 0], sizes = [1, 128], strides = [1, 1]} : vector<3x128xf32> to vector<1x128xf32>
    %4 = arith.cmpf oge, %1, %2 : vector<1x128xf32>
    %5 = arith.cmpf oge, %1, %3 : vector<1x128xf32>
    %6 = arith.andi %4, %5 : vector<1x128xi1>
    %7 = arith.cmpf oge, %2, %3 : vector<1x128xf32>
    %c64_i32 = arith.constant 64 : i32
    %c80_i32 = arith.constant 80 : i32
    %8 = vector.broadcast %c64_i32 : i32 to vector<1x128xi32>
    %9 = vector.broadcast %c80_i32 : i32 to vector<1x128xi32>
    %10 = arith.select %7, %8, %9 : vector<1x128xi1>, vector<1x128xi32>
    %c48_i32 = arith.constant 48 : i32
    %11 = vector.broadcast %c48_i32 : i32 to vector<1x128xi32>
    %12 = arith.select %6, %11, %10 : vector<1x128xi1>, vector<1x128xi32>
    %c0_1 = arith.constant 0 : index
    %c0_2 = arith.constant 0 : index
    %13 = vector.load %arg2[%c0_1, %c0_2] : memref<1x128xi32, #tpu.memory_space<vmem>>, vector<1x128xi32>
    tpu.vector_store %arg2[%c0_1, %c0_2], %12 {strides = array<i32>} : memref<1x128xi32, #tpu.memory_space<vmem>>, vector<1x128xi32>,
    return
  }
  func.func @transform_0(%arg0: i32) -> (i32, i32) {
    %c0_i32 = arith.constant 0 : i32
    %c0_i32_0 = arith.constant 0 : i32
    return %c0_i32, %arg0 : i32, i32
  }
  func.func @transform_1(%arg0: i32) -> (i32, i32) {
    %c0_i32 = arith.constant 0 : i32
    %c0_i32_0 = arith.constant 0 : i32
    return %c0_i32, %arg0 : i32, i32
  }
}

</mosaic_0001>

<llo_original>
// kernel: tpu_custom_call.1
$region0: #{tpu_custom_call.1}
  #allocation0 [shape = 'u32[]', space=smem, size = 0x4, offset = 0x4, fixed_abs, tag = 'smem constant byte address 0x4 - core index']
  #allocation1 [shape = 'u32[144,128]{1,0:T(1,128)}', space=vmem, size = 0x12000, scoped, tag = 'internal scratch']
  %s0 = inlined_call_operand.hbm [shape: f32[3,128], index: 0, kind: input, shape index: {}]
  %s1 = inlined_call_operand.hbm [shape: s32[1,128], index: 1, kind: output, shape index: {}]
  %s2 = sld [smem:[#allocation0]]
  $region18: #{tpu_custom_call.1} parent=0
    _
  %s4 = ssub.s32 1, %s2
  %s5 = scalar_select 0, %s4, %s2
  $region1: #{tpu_custom_call.1} parent=0
    #allocation2 [shape = 'u8[2048]{0}', space=vmem, size = 0x800, scoped, tag = 'input window, operand 0, single buffered']
    #allocation3 [shape = 's32[1]{0}', space=sflag, size = 0x4, scoped, tag = 'scoped memory for tpu_custom_call.1']
    #allocation4 [shape = 's32[1]{0}', space=sflag, size = 0x4, scoped, tag = 'scoped memory for tpu_custom_call.1']
    #allocation5 [shape = 'u8[512]{0}', space=vmem, size = 0x400, scoped, tag = 'output window, operand 0, single buffered']
    %6 = vsyncpa [#allocation3], 0
    %7 = vsyncpa [#allocation4], 0
    // Predicated region
    $region2: #{tpu_custom_call.1} parent=1 // pred_check
      _
    $region3: #{tpu_custom_call.1} parent=1 // pred_check_branch
      %9 = sbr.rel (0) target = $region5
    $region4: #{tpu_custom_call.1} parent=1 // pred_region
      %s11 = ssub.s32 64, 64
      %12 = vsyncadd [#allocation3], %s11
      %s14 = sshll.u32 [#allocation2], 4
      %s15 = int_to_ptr.vmem [resolvable:$true] %s14
      %17 = dma.hbm_to_vmem [thread:$0]  %s0, 64, %s15, [#allocation3]
    $region5: #{tpu_custom_call.1} parent=1 // pred_fallthru
      _
    // Predicated region
    $region6: #{tpu_custom_call.1} parent=1 // pred_check
      _
    $region7: #{tpu_custom_call.1} parent=1 // pred_check_branch
      %19 = sbr.rel (0) target = $region9
    $region8: #{tpu_custom_call.1} parent=1 // pred_region
      %20 = dma.done [#allocation3], 64
    $region9: #{tpu_custom_call.1} parent=1 // pred_fallthru
      _
    %v21 = vld [vmem:[#allocation2] sm:$0x7]
    %v23 = vrot.slane %v21, 1
    %vm25 = vcmp.ge.f32.partialorder %v21, %v23
    %v26 = vrot.slane %v21, 2
    %vm28 = vcmp.ge.f32.partialorder %v21, %v26
    %vm29 = vmand %vm25, %vm28
    %v30 = vsel %vm25, 64, 80
    %v31 = vrot.slane %v30, 1
    %v32 = vsel %vm29, 48, %v31
    %33 = vst [vmem:[#allocation5] sm:$0x1] %v32
    // Predicated region
    $region10: #{tpu_custom_call.1} parent=1 // pred_check
      _
    $region11: #{tpu_custom_call.1} parent=1 // pred_check_branch
      %35 = sbr.rel (0) target = $region13
    $region12: #{tpu_custom_call.1} parent=1 // pred_region
      %s37 = ssub.s32 16, 16
      %38 = vsyncadd [#allocation4], %s37
      %s40 = sshll.u32 [#allocation5], 4
      %s41 = int_to_ptr.vmem [resolvable:$true] %s40
      %43 = dma.vmem_to_hbm [thread:$0]  %s41, 16, %s1, [#allocation4]
    $region13: #{tpu_custom_call.1} parent=1 // pred_fallthru
      _
    // Predicated region
    $region14: #{tpu_custom_call.1} parent=1 // pred_check
      _
    $region15: #{tpu_custom_call.1} parent=1 // pred_check_branch
      %45 = sbr.rel (0) target = $region17
    $region16: #{tpu_custom_call.1} parent=1 // pred_region
      %46 = dma.done [#allocation4], 16
    $region17: #{tpu_custom_call.1} parent=1 // pred_fallthru
      _
    %47 = vsyncpa [#allocation3], 1
    %48 = vsyncpa [#allocation4], 1

</llo_original>
